<compile_context>
chip_gen: v7x
topology: tpu7x:2x2x1
jax: 0.10.0
libtpu: 0.0.40
codegen_flags: <defaults>
</compile_context>

<pallas_src>
import jax
import jax.numpy as jnp
from jax.experimental import pallas as pl
from jax.experimental.pallas import tpu as pltpu


def _mish_kernel(x_ref, o_ref):
    x = x_ref[...].astype(jnp.float32)
    # tanh(softplus(x)) with a single exp:
    #   t = exp(-|x|) in (0, 1]
    #   x >= 0: (1 + 2t)   / (1 + 2t + 2t^2)
    #   x <  0: (2t + t^2) / (2 + 2t + t^2)
    # Large |x| behaves correctly: t underflows to 0 -> tanh_sp -> 1 (x>=0) / 0 (x<0).
    t = jnp.exp(-jnp.abs(x))
    t2 = t * t
    pos = x >= 0.0
    num = jnp.where(pos, 1.0 + 2.0 * t, 2.0 * t + t2)
    den = jnp.where(pos, 1.0 + 2.0 * t + 2.0 * t2, 2.0 + 2.0 * t + t2)
    o_ref[...] = (x * (num / den)).astype(o_ref.dtype)


def _round_up(a, m):
    return ((a + m - 1) // m) * m


def mish(x, *, block_bytes=2 * 1024 * 1024):
    """Elementwise Mish for any shape; computed in a flattened lane-dense 2D layout."""
    orig_shape = x.shape
    orig_dtype = x.dtype
    n = x.size
    itemsize = jnp.dtype(orig_dtype).itemsize

    LANES_MIN = 128
    x_flat = jnp.ravel(x)
    rem = n % LANES_MIN
    padded = rem != 0
    if padded:
        # Only pay the pad/slice HBM pass when the size actually requires it.
        x_flat = jnp.pad(x_flat, (0, LANES_MIN - rem))
    n_pad = x_flat.size

    # Opportunistically widen the lane dim (longer contiguous vld/vst per DMA),
    # but keep enough rows for >= 2 grid steps of 8 sublanes.
    lanes = LANES_MIN
    for cand in (1024, 512, 256):
        if n_pad % cand == 0 and (n_pad // cand) >= 16:
            lanes = cand
            break
    rows = n_pad // lanes
    x2d = x_flat.reshape(rows, lanes)

    # Sublane multiple for the row-block dim (8 for f32, 16 for bf16, 32 for 8-bit).
    sub = max(8, 32 // itemsize)

    if rows <= sub:
        tr = rows  # tiny input: single full-extent block (allowed by the (8,128) rule)
    else:
        tr_target = max(sub, (block_bytes // (lanes * itemsize)) // sub * sub)
        half = _round_up((rows + 1) // 2, sub)  # guarantee >= 2 grid steps (v7x: 2 TCs)
        tr = min(tr_target, half)
    grid = (pl.cdiv(rows, tr),)  # Pallas masks the partial last block

    out2d = pl.pallas_call(
        _mish_kernel,
        out_shape=jax.ShapeDtypeStruct((rows, lanes), orig_dtype),
        grid_spec=pltpu.PrefetchScalarGridSpec(
            num_scalar_prefetch=0,
            grid=grid,
            in_specs=[pl.BlockSpec((tr, lanes), lambda i: (i, 0))],
            out_specs=pl.BlockSpec((tr, lanes), lambda i: (i, 0)),
        ),
        compiler_params=pltpu.CompilerParams(
            dimension_semantics=("parallel",),
            # 4x block bytes (double-buffered in + out) = ~8 MiB at the default
            # 2 MiB blocks; this limit gives headroom on v5e and is valid on v7x.
            vmem_limit_bytes=32 * 1024 * 1024,
        ),
    )(x2d)

    if padded:
        return out2d.reshape(-1)[:n].reshape(orig_shape)
    return out2d.reshape(orig_shape)


def mish_reference(x):
    xf = x.astype(jnp.float32)
    sp = jnp.log1p(jnp.exp(-jnp.abs(xf))) + jnp.maximum(xf, 0.0)  # stable softplus
    return (xf * jnp.tanh(sp)).astype(x.dtype)


if __name__ == "__main__":
    key = jax.random.PRNGKey(0)
    # NCHW activations, consistent with pointnet-style conv layers.
    x = jax.random.normal(key, (2, 4, 16, 16), dtype=jnp.float32) * 3.0

    out = jax.block_until_ready(mish(x))
    ref = mish_reference(x)

    assert out.shape == x.shape and out.dtype == x.dtype
    assert jnp.allclose(out, ref, atol=1e-5, rtol=1e-5), float(
        jnp.max(jnp.abs(out - ref))
    )

    print("KERNEL_OK")
</pallas_src>

<mosaic_0001>
module attributes {stable_mosaic.version = 11 : i64} {
  func.func @_mish_kernel(%arg0: i32, %arg1: memref<8x128xf32, #tpu.memory_space<vmem>>, %arg2: memref<8x128xf32, #tpu.memory_space<vmem>>) attributes {dimension_semantics = [#tpu.dimension_semantics<parallel>], iteration_bounds = array<i64: 2>, scalar_prefetch = 0 : i64, scratch_operands = 0 : i64, tpu.core_type = #tpu.core_type<tc>, window_params = [{transform_indices = @transform_0, window_bounds = array<i64: 8, 128>}, {transform_indices = @transform_1, window_bounds = array<i64: 8, 128>}]} {
    %c0 = arith.constant 0 : index
    %c0_0 = arith.constant 0 : index
    %0 = vector.load %arg1[%c0, %c0_0] : memref<8x128xf32, #tpu.memory_space<vmem>>, vector<8x128xf32>
    %1 = math.absf %0 : vector<8x128xf32>
    %cst = arith.constant 0.000000e+00 : f32
    %2 = vector.broadcast %cst : f32 to vector<8x128xf32>
    %3 = arith.subf %2, %1 : vector<8x128xf32>
    %4 = math.exp %3 : vector<8x128xf32>
    %5 = arith.mulf %4, %4 : vector<8x128xf32>
    %cst_1 = arith.constant 0.000000e+00 : f32
    %6 = vector.broadcast %cst_1 : f32 to vector<8x128xf32>
    %7 = arith.cmpf oge, %0, %6 : vector<8x128xf32>
    %cst_2 = arith.constant 2.000000e+00 : f32
    %8 = vector.broadcast %cst_2 : f32 to vector<8x128xf32>
    %9 = arith.mulf %8, %4 : vector<8x128xf32>
    %cst_3 = arith.constant 1.000000e+00 : f32
    %10 = vector.broadcast %cst_3 : f32 to vector<8x128xf32>
    %11 = arith.addf %10, %9 : vector<8x128xf32>
    %cst_4 = arith.constant 2.000000e+00 : f32
    %12 = vector.broadcast %cst_4 : f32 to vector<8x128xf32>
    %13 = arith.mulf %12, %4 : vector<8x128xf32>
    %14 = arith.addf %13, %5 : vector<8x128xf32>
    %15 = arith.select %7, %11, %14 : vector<8x128xi1>, vector<8x128xf32>
    %cst_5 = arith.constant 2.000000e+00 : f32
    %16 = vector.broadcast %cst_5 : f32 to vector<8x128xf32>
    %17 = arith.mulf %16, %4 : vector<8x128xf32>
    %cst_6 = arith.constant 1.000000e+00 : f32
    %18 = vector.broadcast %cst_6 : f32 to vector<8x128xf32>
    %19 = arith.addf %18, %17 : vector<8x128xf32>
    %cst_7 = arith.constant 2.000000e+00 : f32
    %20 = vector.broadcast %cst_7 : f32 to vector<8x128xf32>
    %21 = arith.mulf %20, %5 : vector<8x128xf32>
    %22 = arith.addf %19, %21 : vector<8x128xf32>
    %cst_8 = arith.constant 2.000000e+00 : f32
    %23 = vector.broadcast %cst_8 : f32 to vector<8x128xf32>
    %24 = arith.mulf %23, %4 : vector<8x128xf32>
    %cst_9 = arith.constant 2.000000e+00 : f32
    %25 = vector.broadcast %cst_9 : f32 to vector<8x128xf32>
    %26 = arith.addf %25, %24 : vector<8x128xf32>
    %27 = arith.addf %26, %5 : vector<8x128xf32>
    %28 = arith.select %7, %22, %27 : vector<8x128xi1>, vector<8x128xf32>
    %29 = arith.divf %15, %28 : vector<8x128xf32>
    %30 = arith.mulf %0, %29 : vector<8x128xf32>
    %c0_10 = arith.constant 0 : index
    %c0_11 = arith.constant 0 : index
    %31 = vector.load %arg2[%c0_10, %c0_11] : memref<8x128xf32, #tpu.memory_space<vmem>>, vector<8x128xf32>
    tpu.vector_store %arg2[%c0_10, %c0_11], %30 {strides = array<i32>} : memref<8x128xf32, #tpu.memory_space<vmem>>, vector<8x128xf32>,
    return
  }
  func.func @transform_0(%arg0: i32) -> (i32, i32) {
    %c0_i32 = arith.constant 0 : i32
    %c0_i32_0 = arith.constant 0 : i32
    return %arg0, %c0_i32 : i32, i32
  }
  func.func @transform_1(%arg0: i32) -> (i32, i32) {
    %c0_i32 = arith.constant 0 : i32
    %c0_i32_0 = arith.constant 0 : i32
    return %arg0, %c0_i32 : i32, i32
  }
}

</mosaic_0001>

<llo_original>
// kernel: tpu_custom_call.1
$region0: #{tpu_custom_call.1}
  #allocation0 [shape = 'u32[]', space=smem, size = 0x4, offset = 0x4, fixed_abs, tag = 'smem constant byte address 0x4 - core index']
  #allocation1 [shape = 'u32[144,128]{1,0:T(1,128)}', space=vmem, size = 0x12000, scoped, tag = 'internal scratch']
  %s0 = inlined_call_operand.hbm [shape: f32[16,128], index: 0, kind: input, shape index: {}]
  %s1 = inlined_call_operand.hbm [shape: f32[16,128], index: 1, kind: output, shape index: {}]
  %s2 = sld [smem:[#allocation0]]
  $region41: #{tpu_custom_call.1} parent=0
    _
  %s4 = ssub.s32 1, %s2
  %s5 = scalar_select 0, %s4, %s2
  $region1: #{tpu_custom_call.1} parent=0
    #allocation2 [shape = 'u8[8192]{0}', space=vmem, size = 0x2000, scoped, tag = 'input window, operand 0']
    #allocation3 [shape = 's32[2]{0}', space=sflag, size = 0x8, scoped, tag = 'scoped memory for tpu_custom_call.1']
    #allocation4 [shape = 's32[2]{0}', space=sflag, size = 0x8, scoped, tag = 'scoped memory for tpu_custom_call.1']
    #allocation5 [shape = 'u8[8192]{0}', space=vmem, size = 0x2000, scoped, tag = 'output window, operand 0']
    %6 = vsyncpa [#allocation3], 0
    %s7 = scalar_lea.sflag [#allocation3], 1
    %8 = vsyncpa %s7, 0
    %9 = vsyncpa [#allocation4], 0
    %s10 = scalar_lea.sflag [#allocation4], 1
    %11 = vsyncpa %s10, 0
    loop: start=0, step=1, limit=4
    $region2: #{tpu_custom_call.1} parent=1 // loop_pre_header
      _
    $region3: #{tpu_custom_call.1} parent=1 // loop_header
      %s13 = sphi 0, %s17
      %p14 = scmp.ge.s32.totalorder %s13, 4
      %s23 = sphi 0, %s25
      %s26 = sphi 0, %s23
      %s27 = sphi 0, %s26
      %s43 = sphi 0, %s27
      %s49 = sphi 0, %s51
      %s52 = sphi 0, %s49
      %s53 = sphi 0, %s52
      %s69 = sphi 0, %s53
    $region4: #{tpu_custom_call.1} parent=1 // loop_header_branch
      %16 = sbr.rel (%p14) target = $region8
    $region5: #{tpu_custom_call.1} parent=1 // loop_body
      %s18 = ssub.s32 %s13, 1
      %s19 = ssub.s32 %s13, 2
      %s20 = sadd.s32 %s13, 1
      %s21 = ssub.s32 %s13, %s20
      %p22 = scmp.eq.s32.totalorder %s21, 0
      %s24 = sadd.s32 %s23, 1
      %s25 = scalar_select %p22, %s23, %s24
      %p28 = pneg %p22
      %p29 = scmp.eq.s32.totalorder %s13, 1
      %p30 = por %p28, %p29
      %p31 = scmp.ne.s32.totalorder %s23, %s26
      %p32 = scmp.eq.s32.totalorder %s13, 0
      %p33 = por %p31, %p32
      %p34 = scmp.ne.s32.totalorder %s23, %s26
      %p35 = scmp.eq.s32.totalorder %s18, 1
      %p36 = por %p34, %p35
      %p37 = scmp.ne.s32.totalorder %s26, %s27
      %p38 = scmp.eq.s32.totalorder %s18, 0
      %p39 = por %p37, %p38
      %p40 = scmp.ne.s32.totalorder %s26, %s27
      %p41 = scmp.eq.s32.totalorder %s19, 1
      %p42 = por %p40, %p41
      %p44 = scmp.ne.s32.totalorder %s27, %s43
      %p45 = scmp.eq.s32.totalorder %s19, 0
      %p46 = por %p44, %p45
      %s47 = ssub.s32 %s13, %s20
      %p48 = scmp.eq.s32.totalorder %s47, 0
      %s50 = sadd.s32 %s49, 1
      %s51 = scalar_select %p48, %s49, %s50
      %p54 = pneg %p48
      %p55 = scmp.eq.s32.totalorder %s13, 1
      %p56 = por %p54, %p55
      %p57 = scmp.ne.s32.totalorder %s49, %s52
      %p58 = scmp.eq.s32.totalorder %s13, 0
      %p59 = por %p57, %p58
      %p60 = scmp.ne.s32.totalorder %s49, %s52
      %p61 = scmp.eq.s32.totalorder %s18, 1
      %p62 = por %p60, %p61
      %p63 = scmp.ne.s32.totalorder %s52, %s53
      %p64 = scmp.eq.s32.totalorder %s18, 0
      %p65 = por %p63, %p64
      %p66 = scmp.ne.s32.totalorder %s52, %s53
      %p67 = scmp.eq.s32.totalorder %s19, 1
      %p68 = por %p66, %p67
      %p70 = scmp.ne.s32.totalorder %s53, %s69
      %p71 = scmp.eq.s32.totalorder %s19, 0
      %p72 = por %p70, %p71
      %p73 = scmp.le.s32.totalorder 1, %s13
      %p74 = scmp.lt.s32.totalorder %s13, 3
      %p75 = pnand %p73, %p74
      %p76 = pneg %p75
      // Predicated region
      $region9: #{tpu_custom_call.1} parent=5 // pred_check
        _
      $region10: #{tpu_custom_call.1} parent=5 // pred_check_branch
        %78 = sbr.rel (%p75) target = $region12
      $region11: #{tpu_custom_call.1} parent=5 // pred_region
        %s79 = ssub.s32 %s13, 1
      $region12: #{tpu_custom_call.1} parent=5 // pred_fallthru
        _
      %p80 = scmp.lt.s32.totalorder %s13, 2
      // Predicated region
      $region13: #{tpu_custom_call.1} parent=5 // pred_check
        %p81 = pneg %p80
      $region14: #{tpu_custom_call.1} parent=5 // pred_check_branch
        %83 = sbr.rel (%p81) target = $region16
      $region15: #{tpu_custom_call.1} parent=5 // pred_region
        // Predicated region
        $region17: #{tpu_custom_call.1} parent=15 // pred_check
          %p84 = pneg %p33
        $region18: #{tpu_custom_call.1} parent=15 // pred_check_branch
          %86 = sbr.rel (%p84) target = $region20
        $region19: #{tpu_custom_call.1} parent=15 // pred_region
          %s87 = sand.u32 %s23, 1
          %s88 = scalar_lea.sflag [#allocation3], %s87
          %s89 = sand.u32 %s23, 1
          %s90 = smul.addr %s89, 8
          %s91 = scalar_lea.vmem [#allocation2], %s90
          %s93 = ssub.s32 128, 128
          %94 = vsyncadd %s88, %s93
          %s95 = smul.addr %s13, 128
          %s96 = scalar_lea.hbm %s0, %s95
          %s98 = sshll.u32 %s91, 4
          %s99 = int_to_ptr.vmem [resolvable:$true] %s98
          %101 = dma.hbm_to_vmem [thread:$0]  %s96, 128, %s99, %s88
        $region20: #{tpu_custom_call.1} parent=15 // pred_fallthru
          _
      $region16: #{tpu_custom_call.1} parent=5 // pred_fallthru
        _
      %p102 = scmp.le.s32.totalorder 1, %s13
      %p103 = scmp.lt.s32.totalorder %s13, 3
      %p104 = pnand %p102, %p103
      %p105 = pneg %p104
      // Predicated region
      $region21: #{tpu_custom_call.1} parent=5 // pred_check
        _
      $region22: #{tpu_custom_call.1} parent=5 // pred_check_branch
        %107 = sbr.rel (%p104) target = $region24
      $region23: #{tpu_custom_call.1} parent=5 // pred_region
        %s108 = ssub.s32 %s13, 1
        %s109 = sand.u32 %s26, 1
        %s110 = scalar_lea.sflag [#allocation3], %s109
        %s111 = sand.u32 %s26, 1
        %s112 = smul.addr %s111, 8
        %s113 = scalar_lea.vmem [#allocation2], %s112
        // Predicated region
        $region25: #{tpu_custom_call.1} parent=23 // pred_check
          %p114 = pneg %p39
        $region26: #{tpu_custom_call.1} parent=23 // pred_check_branch
          %116 = sbr.rel (%p114) target = $region28
        $region27: #{tpu_custom_call.1} parent=23 // pred_region
          %117 = dma.done %s110, 128
        $region28: #{tpu_custom_call.1} parent=23 // pred_fallthru
          _
        %s118 = sand.u32 %s26, 1
        %s119 = scalar_lea.sflag [#allocation3], %s118
        %s120 = sand.u32 %s26, 1
        %s121 = smul.addr %s120, 8
        %s122 = scalar_lea.vmem [#allocation2], %s121
        %p123 = pneg %p39
        %p124 = pneg %p36
        %p125 = pneg %p65
        %p126 = pneg %p62
        %s127 = sand.u32 %s52, 1
        %s128 = scalar_lea.sflag [#allocation4], %s127
        %s129 = sand.u32 %s52, 1
        %s130 = smul.addr %s129, 8
        %s131 = scalar_lea.vmem [#allocation5], %s130
        %v132 = vld [vmem:[%s113] sm:$0xff]
        %v133 = vand.u32 2147483647, %v132
        %v134 = vsub.f32 0.0, %v133
        %v135 = vmul.f32 %v134, 1.442695
        %v136 = vpow.pop %v135
        %v137 = vmul.f32 %v136, %v136
        %vm138 = vcmp.ge.f32.partialorder %v132, 0.0
        %v139 = vmul.f32 %v136, 2.0
        %v140 = vadd.f32 %v139, 1.0
        %v141 = vadd.f32 %v139, %v137
        %v142 = vsel %vm138, %v140, %v141
        %v143 = vmul.f32 %v137, 2.0
        %v144 = vadd.f32 %v140, %v143
        %v145 = vadd.f32 %v139, 2.0
        %v146 = vadd.f32 %v145, %v137
        %v147 = vsel %vm138, %v144, %v146
        %v148 = vrcp.pop %v147
        %v149 = vmul.f32 %v142, %v148
        %v150 = vmul.f32 %v132, %v149
        %151 = vst [vmem:[%s131] sm:$0xff] %v150
        %s152 = sand.u32 %s52, 1
        %s153 = scalar_lea.sflag [#allocation4], %s152
        %s154 = sand.u32 %s52, 1
        %s155 = smul.addr %s154, 8
        %s156 = scalar_lea.vmem [#allocation5], %s155
        // Predicated region
        $region29: #{tpu_custom_call.1} parent=23 // pred_check
          %p157 = pneg %p62
        $region30: #{tpu_custom_call.1} parent=23 // pred_check_branch
          %159 = sbr.rel (%p157) target = $region32
        $region31: #{tpu_custom_call.1} parent=23 // pred_region
          %s161 = ssub.s32 128, 128
          %162 = vsyncadd %s153, %s161
          %s163 = smul.addr %s18, 128
          %s164 = scalar_lea.hbm %s1, %s163
          %s166 = sshll.u32 %s156, 4
          %s167 = int_to_ptr.vmem [resolvable:$true] %s166
          %169 = dma.vmem_to_hbm [thread:$0]  %s167, 128, %s164, %s153
        $region32: #{tpu_custom_call.1} parent=23 // pred_fallthru
          _
      $region24: #{tpu_custom_call.1} parent=5 // pred_fallthru
        _
      %p170 = scmp.le.s32.totalorder 2, %s13
      // Predicated region
      $region33: #{tpu_custom_call.1} parent=5 // pred_check
        %p171 = pneg %p170
      $region34: #{tpu_custom_call.1} parent=5 // pred_check_branch
        %173 = sbr.rel (%p171) target = $region36
      $region35: #{tpu_custom_call.1} parent=5 // pred_region
        %s174 = ssub.s32 %s13, 2
        // Predicated region
        $region37: #{tpu_custom_call.1} parent=35 // pred_check
          %p175 = pneg %p68
        $region38: #{tpu_custom_call.1} parent=35 // pred_check_branch
          %177 = sbr.rel (%p175) target = $region40
        $region39: #{tpu_custom_call.1} parent=35 // pred_region
          %s178 = sand.u32 %s53, 1
          %s179 = scalar_lea.sflag [#allocation4], %s178
          %s180 = sand.u32 %s53, 1
          %s181 = smul.addr %s180, 8
          %s182 = scalar_lea.vmem [#allocation5], %s181
          %183 = dma.done %s179, 128
        $region40: #{tpu_custom_call.1} parent=35 // pred_fallthru
          _
      $region36: #{tpu_custom_call.1} parent=5 // pred_fallthru
        _
    $region6: #{tpu_custom_call.1} parent=1 // loop_footer
      %s17 = sadd.s32 1, %s13
    $region7: #{tpu_custom_call.1} parent=1 // loop_footer_branch
      %12 = sbr.rel target = $region3
    $region8: #{tpu_custom_call.1} parent=1 // loop_exit
      _
    %184 = vsyncpa [#allocation3], 1
    %s185 = scalar_lea.sflag [#allocation3], 1
    %186 = vsyncpa %s185, 1
    %187 = vsyncpa [#allocation4], 1
    %s188 = scalar_lea.sflag [#allocation4], 1
    %189 = vsyncpa %s188, 1

</llo_original>
